<compile_context>
chip_gen: v7x
topology: tpu7x:2x2x1
jax: 0.10.0
libtpu: 0.0.40
codegen_flags: <defaults>
</compile_context>

<pallas_src>
import functools
import math

import jax
import jax.numpy as jnp
from jax.experimental import pallas as pl
from jax.experimental.pallas import tpu as pltpu

H1_PAD = 512   # 500 -> 512  (lane aligned, zero padding is inert: ReLU(0)=0)
H2_PAD = 128   # 100 -> 128


def _fraud_mlp_kernel(x_ref, w1_ref, b1_ref, w2_ref, b2_ref, w3_ref, b3_ref, o_ref):
    # Layer 1: Linear(n_inputs, 500) + ReLU  (bf16 operands, f32 accumulation)
    h1 = jnp.dot(x_ref[...], w1_ref[...], preferred_element_type=jnp.float32)
    h1 = jnp.maximum(h1 + b1_ref[...], 0.0)
    # Layer 2: Linear(500, 100) + ReLU
    h2 = jnp.dot(h1.astype(jnp.bfloat16), w2_ref[...],
                 preferred_element_type=jnp.float32)
    h2 = jnp.maximum(h2 + b2_ref[...], 0.0)
    # Layer 3: Linear(100, 1) + Sigmoid, done as a lane reduction so only a
    # [TB, 1] column is written back (avoids a 128x padded HBM writeback).
    logits = jnp.sum(h2 * w3_ref[...], axis=-1, keepdims=True) + b3_ref[...]
    o_ref[...] = jax.nn.sigmoid(logits)


def _round_up(n, m):
    return ((n + m - 1) // m) * m


def _pad_to(x, shape):
    pads = [(0, t - s) for s, t in zip(x.shape, shape)]
    return jnp.pad(x, pads)


def prepare_fraud_mlp_params(params):
    """One-time parameter prep (outside the jitted forward): pad hidden dims to
    lane-aligned sizes and cast the MXU operands (w1, w2) to bf16."""
    w1, b1, w2, b2, w3, b3 = params
    D, H1 = w1.shape
    H2 = w2.shape[1]
    w1p = _pad_to(w1, (D, H1_PAD)).astype(jnp.bfloat16)
    b1p = _pad_to(b1.reshape(1, H1), (1, H1_PAD)).astype(jnp.float32)
    w2p = _pad_to(w2, (H1_PAD, H2_PAD)).astype(jnp.bfloat16)
    b2p = _pad_to(b2.reshape(1, H2), (1, H2_PAD)).astype(jnp.float32)
    # Layer 3 single output column stored as a [1, 128] f32 row for the VPU/XLU path.
    w3p = _pad_to(w3.reshape(1, H2), (1, H2_PAD)).astype(jnp.float32)
    b3p = b3.reshape(1, 1).astype(jnp.float32)
    return (w1p, b1p, w2p, b2p, w3p, b3p)


@functools.partial(jax.jit, static_argnames=("block_b",))
def fraud_mlp_forward(x, prepared_params, *, block_b=1024):
    """x: [B, n_inputs] float32. Returns [B, 1] float32 sigmoid probabilities."""
    w1p, b1p, w2p, b2p, w3p, b3p = prepared_params
    B, D = x.shape

    # Batch tile: as large as block_b, but no bigger than needed (rounded to 8).
    tb = min(block_b, _round_up(B, 8))
    b_pad = _round_up(B, tb)
    xp = _pad_to(x, (b_pad, D)).astype(jnp.bfloat16)

    const = lambda i: (0, 0)
    flops = 2 * b_pad * (D * H1_PAD + H1_PAD * H2_PAD + H2_PAD)
    bytes_accessed = (
        xp.size * 2 + b_pad * 4                       # activations in / out
        + (w1p.size + w2p.size) * 2                   # bf16 weights
        + (b1p.size + b2p.size + w3p.size + b3p.size) * 4
    )

    out = pl.pallas_call(
        _fraud_mlp_kernel,
        out_shape=jax.ShapeDtypeStruct((b_pad, 1), jnp.float32),
        grid=(b_pad // tb,),
        in_specs=[
            pl.BlockSpec((tb, D), lambda i: (i, 0)),        # x tile (double-buffered)
            pl.BlockSpec((D, H1_PAD), const),               # w1 (resident)
            pl.BlockSpec((1, H1_PAD), const),               # b1
            pl.BlockSpec((H1_PAD, H2_PAD), const),          # w2
            pl.BlockSpec((1, H2_PAD), const),               # b2
            pl.BlockSpec((1, H2_PAD), const),               # w3 (as a row)
            pl.BlockSpec((1, 1), const),                    # b3
        ],
        out_specs=pl.BlockSpec((tb, 1), lambda i: (i, 0)),
        compiler_params=pltpu.CompilerParams(
            dimension_semantics=("parallel",)),
        cost_estimate=pl.CostEstimate(
            flops=flops, transcendentals=b_pad, bytes_accessed=bytes_accessed),
    )(xp, w1p, b1p, w2p, b2p, w3p, b3p)

    return out[:B]


def init_fraud_mlp_params(key, n_inputs, h1=500, h2=100, n_out=1):
    """Deterministic init matching FraudMLP.__init__ (kaiming/xavier uniform +
    PyTorch default Linear bias init). Weights stored as [in, out]."""
    k = jax.random.split(key, 6)

    def kaiming_uniform(rng, fan_in, fan_out):
        bound = math.sqrt(6.0 / fan_in)  # gain=sqrt(2) for relu
        return jax.random.uniform(rng, (fan_in, fan_out), jnp.float32, -bound, bound)

    def xavier_uniform(rng, fan_in, fan_out):
        bound = math.sqrt(6.0 / (fan_in + fan_out))
        return jax.random.uniform(rng, (fan_in, fan_out), jnp.float32, -bound, bound)

    def default_bias(rng, fan_in, fan_out):
        bound = 1.0 / math.sqrt(fan_in)
        return jax.random.uniform(rng, (fan_out,), jnp.float32, -bound, bound)

    w1 = kaiming_uniform(k[0], n_inputs, h1)
    b1 = default_bias(k[1], n_inputs, h1)
    w2 = xavier_uniform(k[2], h1, h2)
    b2 = default_bias(k[3], h1, h2)
    w3 = xavier_uniform(k[4], h2, n_out)
    b3 = default_bias(k[5], h2, n_out)
    return (w1, b1, w2, b2, w3, b3)


def fraud_mlp_reference(x, params):
    """Plain-JAX f32 reference for correctness checking."""
    w1, b1, w2, b2, w3, b3 = params
    h1 = jnp.maximum(x @ w1 + b1, 0.0)
    h2 = jnp.maximum(h1 @ w2 + b2, 0.0)
    return jax.nn.sigmoid(h2 @ w3 + b3)


if __name__ == "__main__":
    key = jax.random.PRNGKey(0)
    k_param, k_x1, k_x2 = jax.random.split(key, 3)

    n_inputs = 32  # synthetic fraud feature count
    batch = 8

    params = init_fraud_mlp_params(k_param, n_inputs)
    prepared = prepare_fraud_mlp_params(params)

    # Small single-tile run.
    x = jax.random.normal(k_x1, (batch, n_inputs), jnp.float32)
    out = jax.block_until_ready(fraud_mlp_forward(x, prepared))
    ref = fraud_mlp_reference(x, params)
    assert out.shape == (batch, 1), out.shape
    # bf16 MXU operands -> loosened tolerance vs f32 reference.
    assert jnp.allclose(out, ref, atol=2e-2, rtol=0.0), "mismatch vs reference (small)"

    # Multi-tile run with a ragged batch (exercises grid + tail padding).
    x2 = jax.random.normal(k_x2, (260, n_inputs), jnp.float32)
    out2 = jax.block_until_ready(fraud_mlp_forward(x2, prepared, block_b=128))
    ref2 = fraud_mlp_reference(x2, params)
    assert out2.shape == (260, 1), out2.shape
    assert jnp.allclose(out2, ref2, atol=2e-2, rtol=0.0), "mismatch vs reference (tiled)"

    print("KERNEL_OK")
</pallas_src>

<mosaic_0001>
module attributes {stable_mosaic.version = 11 : i64} {
  func.func @_fraud_mlp_kernel(%arg0: i32, %arg1: memref<8x32xbf16, #tpu.memory_space<vmem>>, %arg2: memref<32x512xbf16, #tpu.memory_space<vmem>>, %arg3: memref<1x512xf32, #tpu.memory_space<vmem>>, %arg4: memref<512x128xbf16, #tpu.memory_space<vmem>>, %arg5: memref<1x128xf32, #tpu.memory_space<vmem>>, %arg6: memref<1x128xf32, #tpu.memory_space<vmem>>, %arg7: memref<1x1xf32, #tpu.memory_space<vmem>>, %arg8: memref<8x1xf32, #tpu.memory_space<vmem>>) attributes {dimension_semantics = [#tpu.dimension_semantics<parallel>], iteration_bounds = array<i64: 1>, scalar_prefetch = 0 : i64, scratch_operands = 0 : i64, tpu.core_type = #tpu.core_type<tc>, window_params = [{transform_indices = @transform_0, window_bounds = array<i64: 8, 32>}, {pipeline_mode = #tpu.pipeline_mode<synchronous>, transform_indices = @transform_1, window_bounds = array<i64: 32, 512>}, {pipeline_mode = #tpu.pipeline_mode<synchronous>, transform_indices = @transform_2, window_bounds = array<i64: 1, 512>}, {pipeline_mode = #tpu.pipeline_mode<synchronous>, transform_indices = @transform_3, window_bounds = array<i64: 512, 128>}, {pipeline_mode = #tpu.pipeline_mode<synchronous>, transform_indices = @transform_4, window_bounds = array<i64: 1, 128>}, {pipeline_mode = #tpu.pipeline_mode<synchronous>, transform_indices = @transform_5, window_bounds = array<i64: 1, 128>}, {pipeline_mode = #tpu.pipeline_mode<synchronous>, transform_indices = @transform_6, window_bounds = array<i64: 1, 1>}, {transform_indices = @transform_7, window_bounds = array<i64: 8, 1>}]} {
    %c0 = arith.constant 0 : index
    %c0_0 = arith.constant 0 : index
    %0 = vector.load %arg1[%c0, %c0_0] : memref<8x32xbf16, #tpu.memory_space<vmem>>, vector<8x32xbf16>
    %c0_1 = arith.constant 0 : index
    %c0_2 = arith.constant 0 : index
    %1 = vector.load %arg2[%c0_1, %c0_2] : memref<32x512xbf16, #tpu.memory_space<vmem>>, vector<32x512xbf16>
    %cst = arith.constant dense<0.000000e+00> : vector<8x512xf32>
    %2 = tpu.matmul %0, %1, %cst {dimension_numbers = #tpu.dot_dimension_numbers<[1], [0], [0], [1], [0, 0, 1, 1], [], []>} : vector<8x32xbf16>, vector<32x512xbf16>, vector<8x512xf32> -> vector<8x512xf32>
    %c0_3 = arith.constant 0 : index
    %c0_4 = arith.constant 0 : index
    %3 = vector.load %arg3[%c0_3, %c0_4] : memref<1x512xf32, #tpu.memory_space<vmem>>, vector<1x512xf32>
    %4 = vector.broadcast %3 : vector<1x512xf32> to vector<8x512xf32>
    %5 = arith.addf %2, %4 : vector<8x512xf32>
    %cst_5 = arith.constant 0.000000e+00 : f32
    %6 = vector.broadcast %cst_5 : f32 to vector<8x512xf32>
    %7 = arith.maximumf %5, %6 : vector<8x512xf32>
    %8 = arith.truncf %7 : vector<8x512xf32> to vector<8x512xbf16>
    %c0_6 = arith.constant 0 : index
    %c0_7 = arith.constant 0 : index
    %9 = vector.load %arg4[%c0_6, %c0_7] : memref<512x128xbf16, #tpu.memory_space<vmem>>, vector<512x128xbf16>
    %cst_8 = arith.constant dense<0.000000e+00> : vector<8x128xf32>
    %10 = tpu.matmul %8, %9, %cst_8 {dimension_numbers = #tpu.dot_dimension_numbers<[1], [0], [0], [1], [0, 0, 1, 1], [], []>} : vector<8x512xbf16>, vector<512x128xbf16>, vector<8x128xf32> -> vector<8x128xf32>
    %c0_9 = arith.constant 0 : index
    %c0_10 = arith.constant 0 : index
    %11 = vector.load %arg5[%c0_9, %c0_10] : memref<1x128xf32, #tpu.memory_space<vmem>>, vector<1x128xf32>
    %12 = vector.broadcast %11 : vector<1x128xf32> to vector<8x128xf32>
    %13 = arith.addf %10, %12 : vector<8x128xf32>
    %cst_11 = arith.constant 0.000000e+00 : f32
    %14 = vector.broadcast %cst_11 : f32 to vector<8x128xf32>
    %15 = arith.maximumf %13, %14 : vector<8x128xf32>
    %c0_12 = arith.constant 0 : index
    %c0_13 = arith.constant 0 : index
    %16 = vector.load %arg6[%c0_12, %c0_13] : memref<1x128xf32, #tpu.memory_space<vmem>>, vector<1x128xf32>
    %17 = vector.broadcast %16 : vector<1x128xf32> to vector<8x128xf32>
    %18 = arith.mulf %15, %17 : vector<8x128xf32>
    %cst_14 = arith.constant dense<0.000000e+00> : vector<8xf32>
    %19 = vector.multi_reduction <add>, %18, %cst_14 [1] : vector<8x128xf32> to vector<8xf32>
    %20 = vector.shape_cast %19 : vector<8xf32> to vector<8x1xf32>
    %c0_15 = arith.constant 0 : index
    %c0_16 = arith.constant 0 : index
    %21 = vector.load %arg7[%c0_15, %c0_16] : memref<1x1xf32, #tpu.memory_space<vmem>>, vector<1x1xf32>
    %22 = vector.broadcast %21 : vector<1x1xf32> to vector<8x1xf32>
    %23 = arith.addf %20, %22 : vector<8x1xf32>
    %24 = arith.negf %23 : vector<8x1xf32>
    %25 = math.exp %24 : vector<8x1xf32>
    %cst_17 = arith.constant 1.000000e+00 : f32
    %26 = vector.broadcast %cst_17 : f32 to vector<8x1xf32>
    %27 = arith.addf %26, %25 : vector<8x1xf32>
    %28 = arith.divf %26, %27 : vector<8x1xf32>
    %c0_18 = arith.constant 0 : index
    %c0_19 = arith.constant 0 : index
    %29 = vector.load %arg8[%c0_18, %c0_19] : memref<8x1xf32, #tpu.memory_space<vmem>>, vector<8x1xf32>
    tpu.vector_store %arg8[%c0_18, %c0_19], %28 {strides = array<i32>} : memref<8x1xf32, #tpu.memory_space<vmem>>, vector<8x1xf32>,
    return
  }
  func.func @transform_0(%arg0: i32) -> (i32, i32) {
    %c0_i32 = arith.constant 0 : i32
    %c0_i32_0 = arith.constant 0 : i32
    return %arg0, %c0_i32 : i32, i32
  }
  func.func @transform_1(%arg0: i32) -> (i32, i32) {
    %c0_i32 = arith.constant 0 : i32
    %c0_i32_0 = arith.constant 0 : i32
    %c0_i32_1 = arith.constant 0 : i32
    return %c0_i32, %c0_i32_0 : i32, i32
  }
  func.func @transform_2(%arg0: i32) -> (i32, i32) {
    %c0_i32 = arith.constant 0 : i32
    %c0_i32_0 = arith.constant 0 : i32
    %c0_i32_1 = arith.constant 0 : i32
    return %c0_i32, %c0_i32_0 : i32, i32
  }
  func.func @transform_3(%arg0: i32) -> (i32, i32) {
    %c0_i32 = arith.constant 0 : i32
    %c0_i32_0 = arith.constant 0 : i32
    %c0_i32_1 = arith.constant 0 : i32
    return %c0_i32, %c0_i32_0 : i32, i32
  }
  func.func @transform_4(%arg0: i32) -> (i32, i32) {
    %c0_i32 = arith.constant 0 : i32
    %c0_i32_0 = arith.constant 0 : i32
    %c0_i32_1 = arith.constant 0 : i32
    return %c0_i32, %c0_i32_0 : i32, i32
  }
  func.func @transform_5(%arg0: i32) -> (i32, i32) {
    %c0_i32 = arith.constant 0 : i32
    %c0_i32_0 = arith.constant 0 : i32
    %c0_i32_1 = arith.constant 0 : i32
    return %c0_i32, %c0_i32_0 : i32, i32
  }
  func.func @transform_6(%arg0: i32) -> (i32, i32) {
    %c0_i32 = arith.constant 0 : i32
    %c0_i32_0 = arith.constant 0 : i32
    %c0_i32_1 = arith.constant 0 : i32
    return %c0_i32, %c0_i32_0 : i32, i32
  }
  func.func @transform_7(%arg0: i32) -> (i32, i32) {
    %c0_i32 = arith.constant 0 : i32
    %c0_i32_0 = arith.constant 0 : i32
    return %arg0, %c0_i32 : i32, i32
  }
}

</mosaic_0001>

<llo_original>
// kernel: fraud_mlp_forward.1
$region0: #{fraud_mlp_forward.1}
  #allocation0 [shape = 'u32[]', space=smem, size = 0x4, offset = 0x4, fixed_abs, tag = 'smem constant byte address 0x4 - core index']
  #allocation1 [shape = 'u32[144,128]{1,0:T(1,128)}', space=vmem, size = 0x12000, scoped, tag = 'internal scratch']
  #allocation2 [shape = 'f32[1,1]{1,0:T(1,128)S(1)}', space=vmem, size = 0x200, scoped, tag = 'scoped memory for fraud_mlp_forward.1']
  %s0 = inlined_call_operand.vmem [shape: bf16[8,32], index: 0, kind: input, shape index: {}]
  %s1 = inlined_call_operand.hbm [shape: bf16[32,512], index: 1, kind: input, shape index: {}]
  %s2 = inlined_call_operand.vmem [shape: f32[1,512], index: 2, kind: input, shape index: {}]
  %s3 = inlined_call_operand.hbm [shape: bf16[512,128], index: 3, kind: input, shape index: {}]
  %s4 = inlined_call_operand.vmem [shape: f32[1,128], index: 4, kind: input, shape index: {}]
  %s5 = inlined_call_operand.vmem [shape: f32[1,128], index: 5, kind: input, shape index: {}]
  %s6 = inlined_call_operand.<no memory space> [shape: f32[1,1], index: 6, kind: input, shape index: {}]
  %s7 = inlined_call_operand.vmem [shape: f32[8,1], index: 7, kind: output, shape index: {}]
  %s8 = sld [smem:[#allocation0]]
  $region46: #{fraud_mlp_forward.1} parent=0
    _
  %s10 = ssub.s32 1, %s8
  %s11 = scalar_select 0, %s10, %s8
  %v12 = vstv %s6
  %13 = vst [vmem:[#allocation2] sm:$0x1] %v12
  $region1: #{fraud_mlp_forward.1} parent=0
    #allocation3 [shape = 'u8[32768]{0}', space=vmem, size = 0x8000, scoped, tag = 'input window, operand 1, single buffered']
    #allocation4 [shape = 's32[1]{0}', space=sflag, size = 0x4, scoped, tag = 'scoped memory for fraud_mlp_forward.1']
    #allocation5 [shape = 'u8[131072]{0}', space=vmem, size = 0x20000, scoped, tag = 'input window, operand 3, single buffered']
    #allocation6 [shape = 's32[1]{0}', space=sflag, size = 0x4, scoped, tag = 'scoped memory for fraud_mlp_forward.1']
    %14 = vsyncpa [#allocation4], 0
    %15 = vsyncpa [#allocation6], 0
    // Predicated region
    $region2: #{fraud_mlp_forward.1} parent=1 // pred_check
      _
    $region3: #{fraud_mlp_forward.1} parent=1 // pred_check_branch
      %17 = sbr.rel (0) target = $region5
    $region4: #{fraud_mlp_forward.1} parent=1 // pred_region
      _
    $region5: #{fraud_mlp_forward.1} parent=1 // pred_fallthru
      _
    // Predicated region
    $region6: #{fraud_mlp_forward.1} parent=1 // pred_check
      _
    $region7: #{fraud_mlp_forward.1} parent=1 // pred_check_branch
      %19 = sbr.rel (0) target = $region9
    $region8: #{fraud_mlp_forward.1} parent=1 // pred_region
      %s21 = ssub.s32 1024, 1024
      %22 = vsyncadd [#allocation4], %s21
      %s23 = sshll.u32 [#allocation3], 4
      %s24 = int_to_ptr.vmem [resolvable:$true] %s23
      %29 = dma.hbm_to_vmem [thread:$0]  %s1, 1024, %s24, [#allocation4], 256, 256, 16
    $region9: #{fraud_mlp_forward.1} parent=1 // pred_fallthru
      _
    // Predicated region
    $region10: #{fraud_mlp_forward.1} parent=1 // pred_check
      _
    $region11: #{fraud_mlp_forward.1} parent=1 // pred_check_branch
      %31 = sbr.rel (0) target = $region13
    $region12: #{fraud_mlp_forward.1} parent=1 // pred_region
      _
    $region13: #{fraud_mlp_forward.1} parent=1 // pred_fallthru
      _
    // Predicated region
    $region14: #{fraud_mlp_forward.1} parent=1 // pred_check
      _
    $region15: #{fraud_mlp_forward.1} parent=1 // pred_check_branch
      %33 = sbr.rel (0) target = $region17
    $region16: #{fraud_mlp_forward.1} parent=1 // pred_region
      %s35 = ssub.s32 4096, 4096
      %36 = vsyncadd [#allocation6], %s35
      %s37 = sshll.u32 [#allocation5], 4
      %s38 = int_to_ptr.vmem [resolvable:$true] %s37
      %43 = dma.hbm_to_vmem [thread:$0]  %s3, 4096, %s38, [#allocation6], 64, 64, 4
    $region17: #{fraud_mlp_forward.1} parent=1 // pred_fallthru
      _
    // Predicated region
    $region18: #{fraud_mlp_forward.1} parent=1 // pred_check
      _
    $region19: #{fraud_mlp_forward.1} parent=1 // pred_check_branch
      %45 = sbr.rel (0) target = $region21
    $region20: #{fraud_mlp_forward.1} parent=1 // pred_region
      _
    $region21: #{fraud_mlp_forward.1} parent=1 // pred_fallthru
      _
    // Predicated region
    $region22: #{fraud_mlp_forward.1} parent=1 // pred_check
      _
    $region23: #{fraud_mlp_forward.1} parent=1 // pred_check_branch
      %47 = sbr.rel (0) target = $region25
    $region24: #{fraud_mlp_forward.1} parent=1 // pred_region
      _
    $region25: #{fraud_mlp_forward.1} parent=1 // pred_fallthru
      _
    // Predicated region
    $region26: #{fraud_mlp_forward.1} parent=1 // pred_check
      _
    $region27: #{fraud_mlp_forward.1} parent=1 // pred_check_branch
      %49 = sbr.rel (0) target = $region29
    $region28: #{fraud_mlp_forward.1} parent=1 // pred_region
      _
    $region29: #{fraud_mlp_forward.1} parent=1 // pred_fallthru
      _
    // Predicated region
    $region30: #{fraud_mlp_forward.1} parent=1 // pred_check
      _
    $region31: #{fraud_mlp_forward.1} parent=1 // pred_check_branch
      %51 = sbr.rel (0) target = $region33
    $region32: #{fraud_mlp_forward.1} parent=1 // pred_region
      %52 = dma.done [#allocation4], 1024
    $region33: #{fraud_mlp_forward.1} parent=1 // pred_fallthru
      _
    // Predicated region
    $region34: #{fraud_mlp_forward.1} parent=1 // pred_check
      _
    $region35: #{fraud_mlp_forward.1} parent=1 // pred_check_branch
      %54 = sbr.rel (0) target = $region37
    $region36: #{fraud_mlp_forward.1} parent=1 // pred_region
      %55 = dma.done [#allocation6], 4096
    $region37: #{fraud_mlp_forward.1} parent=1 // pred_fallthru
      _
    %v57 = vld [vmem:[%s0] sm:$0xf]
    %v58 = vld [vmem:[#allocation3] sm:$0xff]
    %v59 = vld [vmem:[#allocation3 + $0x8] sm:$0xff]
    %v60 = vld [vmem:[#allocation3 + $0x10] sm:$0xff]
    %v61 = vld [vmem:[#allocation3 + $0x18] sm:$0xff]
    %v62 = vld [vmem:[#allocation3 + $0x20] sm:$0xff]
    %v63 = vld [vmem:[#allocation3 + $0x28] sm:$0xff]
    %v64 = vld [vmem:[#allocation3 + $0x30] sm:$0xff]
    %v65 = vld [vmem:[#allocation3 + $0x38] sm:$0xff]
    %v66 = vld [vmem:[%s2] sm:$0xf]
    %v68 = vlaneseq
    %v69 = vshrl.u32 %v68, 7
    %v70 = vsub.s32 0, %v69
    %v71 = vrot.slane %v66, %v70
    %v72 = vlaneseq
    %v73 = vshrl.u32 %v72, 7
    %v74 = vsub.s32 1, %v73
    %v75 = vrot.slane %v66, %v74
    %v76 = vlaneseq
    %v77 = vshrl.u32 %v76, 7
    %v78 = vsub.s32 2, %v77
    %v79 = vrot.slane %v66, %v78
    %v80 = vlaneseq
    %v81 = vshrl.u32 %v80, 7
    %v82 = vsub.s32 3, %v81
    %v83 = vrot.slane %v66, %v82
    %v96 = vunpack.c.l.b16 %v58
    %v97 = vunpack.c.h.b16 %v58
    %v98 = vunpack.c.l.b16 %v59
    %v99 = vunpack.c.h.b16 %v59
    %v100 = vunpack.c.l.b16 %v60
    %v101 = vunpack.c.h.b16 %v60
    %v102 = vunpack.c.l.b16 %v61
    %v103 = vunpack.c.h.b16 %v61
    %v104 = vunpack.c.l.b16 %v62
    %v105 = vunpack.c.h.b16 %v62
    %v106 = vunpack.c.l.b16 %v63
    %v107 = vunpack.c.h.b16 %v63
    %v108 = vunpack.c.l.b16 %v64
    %v109 = vunpack.c.h.b16 %v64
    %v110 = vunpack.c.l.b16 %v65
    %v111 = vunpack.c.h.b16 %v65
    %v112 = vpack.c.b16 %v100, %v96
    %v113 = vpack.c.b16 %v101, %v97
    %v114 = vpack.c.b16 %v102, %v98
    %v115 = vpack.c.b16 %v103, %v99
    %v116 = vpack.c.b16 %v108, %v104
    %v117 = vpack.c.b16 %v109, %v105
    %v118 = vpack.c.b16 %v110, %v106
    %v119 = vpack.c.b16 %v111, %v107
    %vm128 = vcmask 261120
    %v130 = vsel %vm128, %v57, 0
    %132 = vmatprep.subr.bf16.mxu0 %v113
    %133 = vmatpush1.bf16.msra.mxu0 %v112
    %134 = vmatprep.subr.bf16.mxu0 %v117
    %135 = vmatpush1.bf16.msra.mxu0 %v116
    %136 = vmatprep.subr.bf16.mxu0 0
    %137 = vmatpush1.bf16.msra.mxu0 0
    %138 = vmatprep.subr.bf16.mxu0 0
    %139 = vmatpush1.bf16.msra.mxu0 0
    %140 = vmatprep.subr.bf16.mxu0 0
    %141 = vmatpush1.bf16.msra.mxu0 0
    %142 = vmatprep.subr.bf16.mxu0 0
    %143 = vmatpush1.bf16.msra.mxu0 0
    %144 = vmatprep.subr.bf16.mxu0 0
    %145 = vmatpush1.bf16.msra.mxu0 0
    %146 = vmatprep.subr.bf16.mxu0 0
    %147 = vmatpush1.bf16.msra.mxu0 0
    %148 = vmatprep.subr.bf16.mxu0 0
    %149 = vmatpush1.bf16.msra.mxu0 0
    %150 = vmatprep.subr.bf16.mxu0 0
    %151 = vmatpush1.bf16.msra.mxu0 0
    %152 = vmatprep.subr.bf16.mxu0 0
    %153 = vmatpush1.bf16.msra.mxu0 0
    %154 = vmatprep.subr.bf16.mxu0 0
    %155 = vmatpush1.bf16.msra.mxu0 0
    %156 = vmatprep.subr.bf16.mxu0 0
    %157 = vmatpush1.bf16.msra.mxu0 0
    %158 = vmatprep.subr.bf16.mxu0 0
    %159 = vmatpush1.bf16.msra.mxu0 0
    %160 = vmatprep.subr.bf16.mxu0 0
    %161 = vmatpush1.bf16.msra.mxu0 0
    %162 = vmatprep.subr.bf16.mxu0 0
    %163 = vmatpush1.bf16.msra.mxu0 0
    %164 = vmatprep.mubr.bf16.mxu0 0
    %165 = vmatmul.mubr.bf16.gmra.mrb[0].mxu0 %v130
    %v166 = vpop.f32.mrb[0].mxu0
    %v167 = vadd.f32 %v71, %v166
    %v168 = vpop.f32.mrb[0].mxu0
    %v169 = vadd.f32 %v75, %v168
    %v170 = vpop.f32.mrb[0].mxu0
    %v171 = vpop.f32.mrb[0].mxu0
    %172 = vdwg.mxu0
    %173 = vmatprep.subr.bf16.mxu0 %v115
    %174 = vmatpush1.bf16.msra.mxu0 %v114
    %175 = vmatprep.subr.bf16.mxu0 %v119
    %176 = vmatpush1.bf16.msra.mxu0 %v118
    %177 = vmatprep.subr.bf16.mxu0 0
    %178 = vmatpush1.bf16.msra.mxu0 0
    %179 = vmatprep.subr.bf16.mxu0 0
    %180 = vmatpush1.bf16.msra.mxu0 0
    %181 = vmatprep.subr.bf16.mxu0 0
    %182 = vmatpush1.bf16.msra.mxu0 0
    %183 = vmatprep.subr.bf16.mxu0 0
    %184 = vmatpush1.bf16.msra.mxu0 0
    %185 = vmatprep.subr.bf16.mxu0 0
    %186 = vmatpush1.bf16.msra.mxu0 0
    %187 = vmatprep.subr.bf16.mxu0 0
    %188 = vmatpush1.bf16.msra.mxu0 0
    %189 = vmatprep.subr.bf16.mxu0 0
    %190 = vmatpush1.bf16.msra.mxu0 0
    %191 = vmatprep.subr.bf16.mxu0 0
    %192 = vmatpush1.bf16.msra.mxu0 0
    %193 = vmatprep.subr.bf16.mxu0 0
    %194 = vmatpush1.bf16.msra.mxu0 0
    %195 = vmatprep.subr.bf16.mxu0 0
    %196 = vmatpush1.bf16.msra.mxu0 0
    %197 = vmatprep.subr.bf16.mxu0 0
    %198 = vmatpush1.bf16.msra.mxu0 0
    %199 = vmatprep.subr.bf16.mxu0 0
    %200 = vmatpush1.bf16.msra.mxu0 0
    %201 = vmatprep.subr.bf16.mxu0 0
    %202 = vmatpush1.bf16.msra.mxu0 0
    %203 = vmatprep.subr.bf16.mxu0 0
    %204 = vmatpush1.bf16.msra.mxu0 0
    %205 = vmatprep.mubr.bf16.mxu0 0
    %206 = vmatmul.mubr.bf16.gmra.mrb[0].mxu0 %v130
    %v207 = vpop.f32.mrb[0].mxu0
    %v208 = vadd.f32 %v79, %v207
    %v209 = vpop.f32.mrb[0].mxu0
    %v210 = vadd.f32 %v83, %v209
    %v211 = vpop.f32.mrb[0].mxu0
    %v212 = vpop.f32.mrb[0].mxu0
    %213 = vdwg.mxu0
    %v214 = vmax.f32 %v167, 0.0
    %v215 = vmax.f32 %v169, 0.0
    %v216 = vmax.f32 %v208, 0.0
    %v217 = vmax.f32 %v210, 0.0
    %v218 = vpack.c.bf16 %v214, %v214
    %v219 = vpack.c.bf16 %v215, %v215
    %v220 = vpack.c.bf16 %v216, %v216
    %v221 = vpack.c.bf16 %v217, %v217
    %v222 = vld [vmem:[#allocation5] sm:$0xf]
    %v223 = vld [vmem:[#allocation5 + $0x4] sm:$0xf]
    %v224 = vld [vmem:[#allocation5 + $0x8] sm:$0xf]
    %v225 = vld [vmem:[#allocation5 + $0xc] sm:$0xf]
    %v226 = vld [vmem:[#allocation5 + $0x10] sm:$0xf]
    %v227 = vld [vmem:[#allocation5 + $0x14] sm:$0xf]
    %v228 = vld [vmem:[#allocation5 + $0x18] sm:$0xf]
    %v229 = vld [vmem:[#allocation5 + $0x1c] sm:$0xf]
    %v230 = vld [vmem:[#allocation5 + $0x20] sm:$0xf]
    %v231 = vld [vmem:[#allocation5 + $0x24] sm:$0xf]
    %v232 = vld [vmem:[#allocation5 + $0x28] sm:$0xf]
    %v233 = vld [vmem:[#allocation5 + $0x2c] sm:$0xf]
    %v234 = vld [vmem:[#allocation5 + $0x30] sm:$0xf]
    %v235 = vld [vmem:[#allocation5 + $0x34] sm:$0xf]
    %v236 = vld [vmem:[#allocation5 + $0x38] sm:$0xf]
    %v237 = vld [vmem:[#allocation5 + $0x3c] sm:$0xf]
    %v238 = vld [vmem:[#allocation5 + $0x40] sm:$0xf]
    %v239 = vld [vmem:[#allocation5 + $0x44] sm:$0xf]
    %v240 = vld [vmem:[#allocation5 + $0x48] sm:$0xf]
    %v241 = vld [vmem:[#allocation5 + $0x4c] sm:$0xf]
    %v242 = vld [vmem:[#allocation5 + $0x50] sm:$0xf]
    %v243 = vld [vmem:[#allocation5 + $0x54] sm:$0xf]
    %v244 = vld [vmem:[#allocation5 + $0x58] sm:$0xf]
    %v245 = vld [vmem:[#allocation5 + $0x5c] sm:$0xf]
    %v246 = vld [vmem:[#allocation5 + $0x60] sm:$0xf]
    %v247 = vld [vmem:[#allocation5 + $0x64] sm:$0xf]
    %v248 = vld [vmem:[#allocation5 + $0x68] sm:$0xf]
    %v249 = vld [vmem:[#allocation5 + $0x6c] sm:$0xf]
    %v250 = vld [vmem:[#allocation5 + $0x70] sm:$0xf]
    %v251 = vld [vmem:[#allocation5 + $0x74] sm:$0xf]
    %v252 = vld [vmem:[#allocation5 + $0x78] sm:$0xf]
    %v253 = vld [vmem:[#allocation5 + $0x7c] sm:$0xf]
    %v254 = vld [vmem:[#allocation5 + $0x80] sm:$0xf]
    %v255 = vld [vmem:[#allocation5 + $0x84] sm:$0xf]
    %v256 = vld [vmem:[#allocation5 + $0x88] sm:$0xf]
    %v257 = vld [vmem:[#allocation5 + $0x8c] sm:$0xf]
    %v258 = vld [vmem:[#allocation5 + $0x90] sm:$0xf]
    %v259 = vld [vmem:[#allocation5 + $0x94] sm:$0xf]
    %v260 = vld [vmem:[#allocation5 + $0x98] sm:$0xf]
    %v261 = vld [vmem:[#allocation5 + $0x9c] sm:$0xf]
    %v262 = vld [vmem:[#allocation5 + $0xa0] sm:$0xf]
    %v263 = vld [vmem:[#allocation5 + $0xa4] sm:$0xf]
    %v264 = vld [vmem:[#allocation5 + $0xa8] sm:$0xf]
    %v265 = vld [vmem:[#allocation5 + $0xac] sm:$0xf]
    %v266 = vld [vmem:[#allocation5 + $0xb0] sm:$0xf]
    %v267 = vld [vmem:[#allocation5 + $0xb4] sm:$0xf]
    %v268 = vld [vmem:[#allocation5 + $0xb8] sm:$0xf]
    %v269 = vld [vmem:[#allocation5 + $0xbc] sm:$0xf]
    %v270 = vld [vmem:[#allocation5 + $0xc0] sm:$0xf]
    %v271 = vld [vmem:[#allocation5 + $0xc4] sm:$0xf]
    %v272 = vld [vmem:[#allocation5 + $0xc8] sm:$0xf]
    %v273 = vld [vmem:[#allocation5 + $0xcc] sm:$0xf]
    %v274 = vld [vmem:[#allocation5 + $0xd0] sm:$0xf]
    %v275 = vld [vmem:[#allocation5 + $0xd4] sm:$0xf]
    %v276 = vld [vmem:[#allocation5 + $0xd8] sm:$0xf]
    %v277 = vld [vmem:[#allocation5 + $0xdc] sm:$0xf]
    %v278 = vld [vmem:[#allocation5 + $0xe0] sm:$0xf]
    %v279 = vld [vmem:[#allocation5 + $0xe4] sm:$0xf]
    %v280 = vld [vmem:[#allocation5 + $0xe8] sm:$0xf]
    %v281 = vld [vmem:[#allocation5 + $0xec] sm:$0xf]
    %v282 = vld [vmem:[#allocation5 + $0xf0] sm:$0xf]
    %v283 = vld [vmem:[#allocation5 + $0xf4] sm:$0xf]
    %v284 = vld [vmem:[#allocation5 + $0xf8] sm:$0xf]
    %v285 = vld [vmem:[#allocation5 + $0xfc] sm:$0xf]
    %v286 = vld [vmem:[%s4] sm:$0x1]
    %v288 = vlaneseq
    %v289 = vshrl.u32 %v288, 7
    %v290 = vsub.s32 0, %v289
    %v291 = vrot.slane %v286, %v290
    %v357 = vunpack.c.l.b16 %v222
    %v358 = vunpack.c.l.b16 %v223
    %v359 = vunpack.c.l.b16 %v224
    %v360 = vunpack.c.l.b16 %v225
    %v361 = vunpack.c.l.b16 %v226
    %v362 = vunpack.c.l.b16 %v227
    %v363 = vunpack.c.l.b16 %v228
    %v364 = vunpack.c.l.b16 %v229
    %v365 = vunpack.c.l.b16 %v230
    %v366 = vunpack.c.l.b16 %v231
    %v367 = vunpack.c.l.b16 %v232
    %v368 = vunpack.c.l.b16 %v233
    %v369 = vunpack.c.l.b16 %v234
    %v370 = vunpack.c.l.b16 %v235
    %v371 = vunpack.c.l.b16 %v236
    %v372 = vunpack.c.l.b16 %v237
    %v373 = vunpack.c.l.b16 %v238
    %v374 = vunpack.c.l.b16 %v239
    %v375 = vunpack.c.l.b16 %v240
    %v376 = vunpack.c.l.b16 %v241
    %v377 = vunpack.c.l.b16 %v242
    %v378 = vunpack.c.l.b16 %v243
    %v379 = vunpack.c.l.b16 %v244
    %v380 = vunpack.c.l.b16 %v245
    %v381 = vunpack.c.l.b16 %v246
    %v382 = vunpack.c.l.b16 %v247
    %v383 = vunpack.c.l.b16 %v248
    %v384 = vunpack.c.l.b16 %v249
    %v385 = vunpack.c.l.b16 %v250
    %v386 = vunpack.c.l.b16 %v251
    %v387 = vunpack.c.l.b16 %v252
    %v388 = vunpack.c.l.b16 %v253
    %v389 = vunpack.c.l.b16 %v254
    %v390 = vunpack.c.l.b16 %v255
    %v391 = vunpack.c.l.b16 %v256
    %v392 = vunpack.c.l.b16 %v257
    %v393 = vunpack.c.l.b16 %v258
    %v394 = vunpack.c.l.b16 %v259
    %v395 = vunpack.c.l.b16 %v260
    %v396 = vunpack.c.l.b16 %v261
    %v397 = vunpack.c.l.b16 %v262
    %v398 = vunpack.c.l.b16 %v263
    %v399 = vunpack.c.l.b16 %v264
    %v400 = vunpack.c.l.b16 %v265
    %v401 = vunpack.c.l.b16 %v266
    %v402 = vunpack.c.l.b16 %v267
    %v403 = vunpack.c.l.b16 %v268
    %v404 = vunpack.c.l.b16 %v269
    %v405 = vunpack.c.l.b16 %v270
    %v406 = vunpack.c.l.b16 %v271
    %v407 = vunpack.c.l.b16 %v272
    %v408 = vunpack.c.l.b16 %v273
    %v409 = vunpack.c.l.b16 %v274
    %v410 = vunpack.c.l.b16 %v275
    %v411 = vunpack.c.l.b16 %v276
    %v412 = vunpack.c.l.b16 %v277
    %v413 = vunpack.c.l.b16 %v278
    %v414 = vunpack.c.l.b16 %v279
    %v415 = vunpack.c.l.b16 %v280
    %v416 = vunpack.c.l.b16 %v281
    %v417 = vunpack.c.l.b16 %v282
    %v418 = vunpack.c.l.b16 %v283
    %v419 = vunpack.c.l.b16 %v284
    %v420 = vunpack.c.l.b16 %v285
    %v421 = vpack.c.b16 %v358, %v357
    %v422 = vpack.c.b16 %v360, %v359
    %v423 = vpack.c.b16 %v362, %v361
    %v424 = vpack.c.b16 %v364, %v363
    %v425 = vpack.c.b16 %v366, %v365
    %v426 = vpack.c.b16 %v368, %v367
    %v427 = vpack.c.b16 %v370, %v369
    %v428 = vpack.c.b16 %v372, %v371
    %v429 = vpack.c.b16 %v374, %v373
    %v430 = vpack.c.b16 %v376, %v375
    %v431 = vpack.c.b16 %v378, %v377
    %v432 = vpack.c.b16 %v380, %v379
    %v433 = vpack.c.b16 %v382, %v381
    %v434 = vpack.c.b16 %v384, %v383
    %v435 = vpack.c.b16 %v386, %v385
    %v436 = vpack.c.b16 %v388, %v387
    %v437 = vpack.c.b16 %v390, %v389
    %v438 = vpack.c.b16 %v392, %v391
    %v439 = vpack.c.b16 %v394, %v393
    %v440 = vpack.c.b16 %v396, %v395
    %v441 = vpack.c.b16 %v398, %v397
    %v442 = vpack.c.b16 %v400, %v399
    %v443 = vpack.c.b16 %v402, %v401
    %v444 = vpack.c.b16 %v404, %v403
    %v445 = vpack.c.b16 %v406, %v405
    %v446 = vpack.c.b16 %v408, %v407
    %v447 = vpack.c.b16 %v410, %v409
    %v448 = vpack.c.b16 %v412, %v411
    %v449 = vpack.c.b16 %v414, %v413
    %v450 = vpack.c.b16 %v416, %v415
    %v451 = vpack.c.b16 %v418, %v417
    %v452 = vpack.c.b16 %v420, %v419
    %485 = vmatprep.subr.bf16.mxu0 0
    %486 = vmatpush1.bf16.msra.mxu0 %v421
    %487 = vmatprep.subr.bf16.mxu0 0
    %488 = vmatpush1.bf16.msra.mxu0 %v422
    %489 = vmatprep.subr.bf16.mxu0 0
    %490 = vmatpush1.bf16.msra.mxu0 %v423
    %491 = vmatprep.subr.bf16.mxu0 0
    %492 = vmatpush1.bf16.msra.mxu0 %v424
    %493 = vmatprep.subr.bf16.mxu0 0
    %494 = vmatpush1.bf16.msra.mxu0 %v425
    %495 = vmatprep.subr.bf16.mxu0 0
    %496 = vmatpush1.bf16.msra.mxu0 %v426
    %497 = vmatprep.subr.bf16.mxu0 0
    %498 = vmatpush1.bf16.msra.mxu0 %v427
    %499 = vmatprep.subr.bf16.mxu0 0
    %500 = vmatpush1.bf16.msra.mxu0 %v428
    %501 = vmatprep.subr.bf16.mxu0 0
    %502 = vmatpush1.bf16.msra.mxu0 %v429
    %503 = vmatprep.subr.bf16.mxu0 0
    %504 = vmatpush1.bf16.msra.mxu0 %v430
    %505 = vmatprep.subr.bf16.mxu0 0
    %506 = vmatpush1.bf16.msra.mxu0 %v431
    %507 = vmatprep.subr.bf16.mxu0 0
    %508 = vmatpush1.bf16.msra.mxu0 %v432
    %509 = vmatprep.subr.bf16.mxu0 0
    %510 = vmatpush1.bf16.msra.mxu0 %v433
    %511 = vmatprep.subr.bf16.mxu0 0
    %512 = vmatpush1.bf16.msra.mxu0 %v434
    %513 = vmatprep.subr.bf16.mxu0 0
    %514 = vmatpush1.bf16.msra.mxu0 %v435
    %515 = vmatprep.subr.bf16.mxu0 0
    %516 = vmatpush1.bf16.msra.mxu0 %v436
    %517 = vmatprep.mubr.bf16.mxu0 %v219
    %518 = vmatmul.mubr.bf16.gmra.mrb[0].mxu0 %v218
    %v519 = vpop.f32.mrb[0].mxu0
    %v520 = vadd.f32 %v291, %v519
    %v521 = vpop.f32.mrb[0].mxu0
    %v522 = vpop.f32.mrb[0].mxu0
    %v523 = vpop.f32.mrb[0].mxu0
    %524 = vdwg.mxu0
    %525 = vmatprep.subr.bf16.mxu0 0
    %526 = vmatpush1.bf16.msra.mxu0 %v437
    %527 = vmatprep.subr.bf16.mxu0 0
    %528 = vmatpush1.bf16.msra.mxu0 %v438
    %529 = vmatprep.subr.bf16.mxu0 0
    %530 = vmatpush1.bf16.msra.mxu0 %v439
    %531 = vmatprep.subr.bf16.mxu0 0
    %532 = vmatpush1.bf16.msra.mxu0 %v440
    %533 = vmatprep.subr.bf16.mxu0 0
    %534 = vmatpush1.bf16.msra.mxu0 %v441
    %535 = vmatprep.subr.bf16.mxu0 0
    %536 = vmatpush1.bf16.msra.mxu0 %v442
    %537 = vmatprep.subr.bf16.mxu0 0
    %538 = vmatpush1.bf16.msra.mxu0 %v443
    %539 = vmatprep.subr.bf16.mxu0 0
    %540 = vmatpush1.bf16.msra.mxu0 %v444
    %541 = vmatprep.subr.bf16.mxu0 0
    %542 = vmatpush1.bf16.msra.mxu0 %v445
    %543 = vmatprep.subr.bf16.mxu0 0
    %544 = vmatpush1.bf16.msra.mxu0 %v446
    %545 = vmatprep.subr.bf16.mxu0 0
    %546 = vmatpush1.bf16.msra.mxu0 %v447
    %547 = vmatprep.subr.bf16.mxu0 0
    %548 = vmatpush1.bf16.msra.mxu0 %v448
    %549 = vmatprep.subr.bf16.mxu0 0
    %550 = vmatpush1.bf16.msra.mxu0 %v449
    %551 = vmatprep.subr.bf16.mxu0 0
    %552 = vmatpush1.bf16.msra.mxu0 %v450
    %553 = vmatprep.subr.bf16.mxu0 0
    %554 = vmatpush1.bf16.msra.mxu0 %v451
    %555 = vmatprep.subr.bf16.mxu0 0
    %556 = vmatpush1.bf16.msra.mxu0 %v452
    %557 = vmatprep.mubr.bf16.mxu0 %v221
    %558 = vmatmul.mubr.bf16.gmra.mrb[0].mxu0 %v220
    %v559 = vpop.f32.mrb[0].mxu0
    %v560 = vadd.f32 %v520, %v559
    %v561 = vpop.f32.mrb[0].mxu0
    %v562 = vpop.f32.mrb[0].mxu0
    %v563 = vpop.f32.mrb[0].mxu0
    %564 = vdwg.mxu0
    %v565 = vmax.f32 %v560, 0.0
    %v566 = vld [vmem:[%s5] sm:$0x1]
    %v568 = vlaneseq
    %v569 = vshrl.u32 %v568, 7
    %v570 = vsub.s32 0, %v569
    %v571 = vrot.slane %v566, %v570
    %v573 = vmul.f32 %v565, %v571
    %574 = vadd.xlane.f32.xlu0 %v573
    %v575 = vpop.xlane.xlu0 %574
    %v576 = vld [vmem:[#allocation2] sm:$0x1]
    %v578 = vlaneseq
    %v579 = vshrl.u32 %v578, 7
    %v580 = vsub.s32 0, %v579
    %v581 = vrot.slane %v576, %v580
    %v583 = vadd.f32 %v575, %v581
    %v584 = vxor.u32 %v583, 2147483648
    %v585 = vmul.f32 %v584, 1.442695
    %v586 = vpow.pop %v585
    %v587 = vadd.f32 %v586, 1.0
    %v588 = vrcp.pop %v587
    %v589 = vmul.f32 1.0, %v588
    %vm590 = vcmask 7168
    %591 = vst.msk [vmem:[%s7] sm:$0xff] %vm590, %v589
    // Predicated region
    $region38: #{fraud_mlp_forward.1} parent=1 // pred_check
      _
    $region39: #{fraud_mlp_forward.1} parent=1 // pred_check_branch
      %593 = sbr.rel (0) target = $region41
    $region40: #{fraud_mlp_forward.1} parent=1 // pred_region
      _
    $region41: #{fraud_mlp_forward.1} parent=1 // pred_fallthru
      _
    // Predicated region
    $region42: #{fraud_mlp_forward.1} parent=1 // pred_check
      _
    $region43: #{fraud_mlp_forward.1} parent=1 // pred_check_branch
      %595 = sbr.rel (0) target = $region45
    $region44: #{fraud_mlp_forward.1} parent=1 // pred_region
      _
    $region45: #{fraud_mlp_forward.1} parent=1 // pred_fallthru
      _
    %596 = vsyncpa [#allocation4], 1
    %597 = vsyncpa [#allocation6], 1

</llo_original>
